<compile_context>
chip_gen: v7x
topology: tpu7x:2x2x1
jax: 0.10.0
libtpu: 0.0.40
codegen_flags: <defaults>
</compile_context>

<pallas_src>
import functools

import jax
import jax.numpy as jnp
from jax.experimental import pallas as pl
from jax.experimental.pallas import tpu as pltpu


# ----------------------------- helpers -------------------------------------


def _round_up(v, m):
    return (v + m - 1) // m * m


def _sublane_align(dtype):
    bits = jnp.dtype(dtype).itemsize * 8
    if bits >= 32:
        return 8
    if bits == 16:
        return 16
    return 32


def _vmem_budget_bytes():
    """Generation-aware (tile-buffer budget, scoped vmem limit)."""
    cap = 64 * 1024 * 1024  # assume the smallest generation (v7x) if unknown
    try:
        info = pltpu.get_tpu_info()
        cap = getattr(info, "vmem_capacity_bytes", cap) or cap
    except Exception:
        pass
    if cap >= 100 * 1024 * 1024:              # v5e / v6e: 128 MiB physical
        return 80 * 1024 * 1024, 96 * 1024 * 1024
    return 40 * 1024 * 1024, 48 * 1024 * 1024  # v7x: 64 MiB physical


def _pick_tile(dim, max_tile, align, min_tile, waste_cap=0.125):
    """Largest useful tile for `dim`, bounded-waste when `dim` > max_tile."""
    dim_al = _round_up(dim, align)
    if dim_al <= max_tile:
        return dim_al                          # whole (aligned) dim in one tile
    cands = []
    c = max_tile
    lo = max(min_tile, align)
    while c >= lo:
        cands.append(c)
        c //= 2
    for c in cands:                            # largest first, bounded padding
        if _round_up(dim, c) - dim <= waste_cap * dim:
            return c
    return min(cands, key=lambda c: (_round_up(dim, c), -c))


def _shrink(t, align, floor):
    nt = max(floor, _round_up(t // 2, align))
    return nt if nt < t else t


# ------------------------------ kernel -------------------------------------


def _mul_linear_kernel(*refs, apply_scale, use_acc, compute_dtype):
    # Ref order: x, [scale], weight.T tile, bias, out, [acc scratch]
    if apply_scale:
        x_ref, s_ref, w_ref, b_ref, o_ref = refs[:5]
        rest = refs[5:]
    else:
        x_ref, w_ref, b_ref, o_ref = refs[:4]
        s_ref = None
        rest = refs[4:]
    # f32 outputs accumulate directly into the resident output block.
    acc_ref = rest[0] if use_acc else o_ref

    k = pl.program_id(2)

    @pl.when(k == 0)
    def _():
        acc_ref[...] = jnp.zeros_like(acc_ref)

    x = x_ref[...]
    if apply_scale:
        # scale is fully VMEM-resident, shaped (Kgrid, tk); slice row k.
        x = x * s_ref[pl.ds(k, 1), :]                       # VPU
    w = w_ref[...]
    if compute_dtype is not None:
        x = x.astype(compute_dtype)
        w = w.astype(compute_dtype)
    acc_ref[...] += jnp.dot(x, w, preferred_element_type=jnp.float32)  # MXU

    @pl.when(k == pl.num_programs(2) - 1)
    def _():
        o_ref[...] = (acc_ref[...]
                      + b_ref[...].astype(jnp.float32)).astype(o_ref.dtype)


# --------------------------- host-side wrappers -----------------------------


def prepare_mul_linear(weight, bias, input_scale, *,
                       fold_scale_into_weight=False,
                       compute_dtype=None,
                       max_tile=1024,
                       x_dtype=jnp.float32):
    """One-time (per layer) preparation, hoisted out of the forward hot path.

    weight: [N, K], bias: [N], input_scale: [K].
    Transposes the weight to [K, N], optionally folds the scale into it
    (numerics-changing, off by default), optionally pre-casts it to
    `compute_dtype`, picks N/K tiles within a generation-aware VMEM budget,
    and zero-pads everything to tile multiples.
    """
    N, K = weight.shape
    budget, vmem_limit = _vmem_budget_bytes()

    w_store_dtype = compute_dtype if compute_dtype is not None else weight.dtype
    x_b = jnp.dtype(x_dtype).itemsize
    w_b = jnp.dtype(w_store_dtype).itemsize
    o_b = jnp.dtype(x_dtype).itemsize
    use_acc_guess = jnp.dtype(x_dtype) != jnp.dtype(jnp.float32)

    tn = _pick_tile(N, max_tile, 128, 128)
    tk = _pick_tile(K, max_tile, 128, 128)
    tm_cap = _round_up(max_tile, 8)

    def footprint(tm_, tn_, tk_):
        f = 2 * tm_ * tk_ * x_b + 2 * tk_ * tn_ * w_b + 2 * tm_ * tn_ * o_b
        if use_acc_guess:
            f += tm_ * tn_ * 4
        f += 2 * _round_up(K, tk_) * 4 + 2 * _round_up(N, tn_) * 4  # scale+bias
        return f

    # Shrink tiles (largest first, 128-aligned) until the double-buffered
    # footprint fits the per-generation budget.
    while footprint(tm_cap, tn, tk) > budget:
        opts = []
        nt = _shrink(tm_cap, 8, 128)
        if nt < tm_cap:
            opts.append(("tm", tm_cap, nt))
        nt = _shrink(tn, 128, 128)
        if nt < tn:
            opts.append(("tn", tn, nt))
        nt = _shrink(tk, 128, 128)
        if nt < tk:
            opts.append(("tk", tk, nt))
        if not opts:
            break
        name, _, nt = max(opts, key=lambda o: o[1])
        if name == "tm":
            tm_cap = nt
        elif name == "tn":
            tn = nt
        else:
            tk = nt

    Np, Kp = _round_up(N, tn), _round_up(K, tk)

    # Weight: optional scale fold, transpose to [K, N], pad, optional pre-cast.
    w_t = weight
    if fold_scale_into_weight:
        w_t = w_t * input_scale[None, :]
    w_t = w_t.T.astype(w_store_dtype)
    if (Kp, Np) != (K, N):
        w_t = jnp.pad(w_t, ((0, Kp - K), (0, Np - N)))

    bias2d = bias.reshape(1, N)
    if Np != N:
        bias2d = jnp.pad(bias2d, ((0, 0), (0, Np - N)))

    scale_res = None
    if not fold_scale_into_weight:
        s = input_scale
        if Kp != K:
            s = jnp.pad(s, (0, Kp - K))
        scale_res = s.reshape(Kp // tk, tk)     # VMEM-resident, row per k-step

    return {
        "N": N, "K": K, "Np": Np, "Kp": Kp,
        "tn": tn, "tk": tk, "tm_cap": tm_cap,
        "w_t": w_t, "bias2d": bias2d, "scale_res": scale_res,
        "compute_dtype": compute_dtype,
        "vmem_limit": vmem_limit,
    }


def mul_linear_prepared(x, prep):
    """Forward: Y = (X * input_scale) @ W.T + b, using prepared weights."""
    orig_shape = x.shape
    K = orig_shape[-1]
    N = prep["N"]
    assert K == prep["K"], "in_features mismatch with prepared weights"

    x2d = x.reshape(-1, K)
    M = x2d.shape[0]

    tn, tk = prep["tn"], prep["tk"]
    Np, Kp = prep["Np"], prep["Kp"]

    # M tile: whole aligned M when it fits; otherwise bounded-waste tile.
    tm = _pick_tile(M, prep["tm_cap"], _sublane_align(x.dtype),
                    min(128, prep["tm_cap"]), waste_cap=0.25)
    Mp = _round_up(M, tm)

    # v7x has 2 TensorCores: expose >=2 tiles along a "parallel" axis for
    # single-tile problems so both cores get work.
    if Mp // tm == 1 and Np // tn == 1 and tn % 256 == 0:
        tn //= 2

    if (Mp, Kp) != (M, K):
        x2d = jnp.pad(x2d, ((0, Mp - M), (0, Kp - K)))

    grid = (Mp // tm, Np // tn, Kp // tk)
    out_dtype = x.dtype
    use_acc = jnp.dtype(out_dtype) != jnp.dtype(jnp.float32)
    apply_scale = prep["scale_res"] is not None

    in_specs = [pl.BlockSpec((tm, tk), lambda i, j, k: (i, k))]       # x tile
    operands = [x2d]
    if apply_scale:
        kg, tkk = prep["scale_res"].shape
        in_specs.append(pl.BlockSpec((kg, tkk), lambda i, j, k: (0, 0)))  # resident scale
        operands.append(prep["scale_res"])
    in_specs += [
        pl.BlockSpec((tk, tn), lambda i, j, k: (k, j)),               # W.T tile
        pl.BlockSpec((1, tn), lambda i, j, k: (0, j)),                # bias slice
    ]
    operands += [prep["w_t"], prep["bias2d"]]

    kernel = functools.partial(
        _mul_linear_kernel,
        apply_scale=apply_scale,
        use_acc=use_acc,
        compute_dtype=prep["compute_dtype"],
    )

    out2d = pl.pallas_call(
        kernel,
        out_shape=jax.ShapeDtypeStruct((Mp, Np), out_dtype),
        grid_spec=pltpu.PrefetchScalarGridSpec(
            num_scalar_prefetch=0,
            grid=grid,
            in_specs=in_specs,
            out_specs=pl.BlockSpec((tm, tn), lambda i, j, k: (i, j)),
            scratch_shapes=([pltpu.VMEM((tm, tn), jnp.float32)]
                            if use_acc else []),
        ),
        compiler_params=pltpu.CompilerParams(
            dimension_semantics=("parallel", "parallel", "arbitrary"),
            vmem_limit_bytes=prep["vmem_limit"],
        ),
    )(*operands)

    out2d = out2d[:M, :N]
    return out2d.reshape(*orig_shape[:-1], N)


def mul_linear(x, input_scale, weight, bias, **prep_kwargs):
    """One-shot convenience wrapper (prep + forward in one call)."""
    prep = prepare_mul_linear(weight, bias, input_scale,
                              x_dtype=x.dtype, **prep_kwargs)
    return mul_linear_prepared(x, prep)


# ---------------------------------- demo ------------------------------------


if __name__ == "__main__":
    # Small shapes consistent with the module: batch=2, seq=8, in_features=32,
    # out_features=64.
    batch, seq, in_features, out_features = 2, 8, 32, 64

    key = jax.random.PRNGKey(0)
    kx, ks, kw, kb = jax.random.split(key, 4)

    x = jax.random.normal(kx, (batch, seq, in_features), dtype=jnp.float32)
    input_scale = jax.random.uniform(ks, (in_features,), dtype=jnp.float32,
                                     minval=0.5, maxval=1.5)
    weight = jax.random.normal(kw, (out_features, in_features),
                               dtype=jnp.float32) * 0.1
    bias = jax.random.normal(kb, (out_features,), dtype=jnp.float32) * 0.1

    # Pure-JAX reference of the torch forward.
    ref = (x * input_scale) @ weight.T + bias

    # Recommended path: one-time weight prep (hoisted), then a jitted forward.
    prep = prepare_mul_linear(weight, bias, input_scale)
    fwd = jax.jit(lambda xx: mul_linear_prepared(xx, prep))
    out = jax.block_until_ready(fwd(x))
    assert out.shape == (batch, seq, out_features)
    assert jnp.allclose(out, ref, atol=1e-5, rtol=1e-5)

    # One-shot convenience wrapper (same semantics / rounding order).
    out2 = jax.block_until_ready(mul_linear(x, input_scale, weight, bias))
    assert jnp.allclose(out2, ref, atol=1e-5, rtol=1e-5)

    # Optional fast path: fold the scale into the weight at prep time
    # (numerics-changing vs torch -> looser tolerance).
    prep_fold = prepare_mul_linear(weight, bias, input_scale,
                                   fold_scale_into_weight=True)
    out3 = jax.block_until_ready(mul_linear_prepared(x, prep_fold))
    assert jnp.allclose(out3, ref, atol=1e-4, rtol=1e-4)

    print("KERNEL_OK")
</pallas_src>

<mosaic_0001>
module attributes {stable_mosaic.version = 11 : i64} {
  func.func @_mul_linear_kernel(%arg0: i32, %arg1: i32, %arg2: i32, %arg3: memref<16x128xf32, #tpu.memory_space<vmem>>, %arg4: memref<1x128xf32, #tpu.memory_space<vmem>>, %arg5: memref<128x128xf32, #tpu.memory_space<vmem>>, %arg6: memref<1x128xf32, #tpu.memory_space<vmem>>, %arg7: memref<16x128xf32, #tpu.memory_space<vmem>>) attributes {dimension_semantics = [#tpu.dimension_semantics<parallel>, #tpu.dimension_semantics<parallel>, #tpu.dimension_semantics<arbitrary>], iteration_bounds = array<i64: 1, 1, 1>, scalar_prefetch = 0 : i64, scratch_operands = 0 : i64, tpu.core_type = #tpu.core_type<tc>, window_params = [{transform_indices = @transform_0, window_bounds = array<i64: 16, 128>}, {pipeline_mode = #tpu.pipeline_mode<synchronous>, transform_indices = @transform_1, window_bounds = array<i64: 1, 128>}, {transform_indices = @transform_2, window_bounds = array<i64: 128, 128>}, {transform_indices = @transform_3, window_bounds = array<i64: 1, 128>}, {transform_indices = @transform_4, window_bounds = array<i64: 16, 128>}]} {
    %c0_i32 = arith.constant 0 : i32
    %0 = arith.cmpi eq, %arg2, %c0_i32 : i32
    %1 = arith.extui %0 : i1 to i32
    %c0_i32_0 = arith.constant 0 : i32
    %2 = arith.cmpi ne, %1, %c0_i32_0 : i32
    scf.if %2 {
      %cst_11 = arith.constant 0.000000e+00 : f32
      %16 = vector.broadcast %cst_11 : f32 to vector<16x128xf32>
      %c0_12 = arith.constant 0 : index
      %c0_13 = arith.constant 0 : index
      %17 = vector.load %arg7[%c0_12, %c0_13] : memref<16x128xf32, #tpu.memory_space<vmem>>, vector<16x128xf32>
      tpu.vector_store %arg7[%c0_12, %c0_13], %16 {strides = array<i32>} : memref<16x128xf32, #tpu.memory_space<vmem>>, vector<16x128xf32>,
    } else {
    }
    %c0 = arith.constant 0 : index
    %c0_1 = arith.constant 0 : index
    %3 = vector.load %arg3[%c0, %c0_1] : memref<16x128xf32, #tpu.memory_space<vmem>>, vector<16x128xf32>
    %4 = arith.index_cast %arg2 : i32 to index
    %c0_2 = arith.constant 0 : index
    %5 = vector.load %arg4[%4, %c0_2] : memref<1x128xf32, #tpu.memory_space<vmem>>, vector<1x128xf32>
    %6 = vector.broadcast %5 : vector<1x128xf32> to vector<16x128xf32>
    %7 = arith.mulf %3, %6 : vector<16x128xf32>
    %c0_3 = arith.constant 0 : index
    %c0_4 = arith.constant 0 : index
    %8 = vector.load %arg5[%c0_3, %c0_4] : memref<128x128xf32, #tpu.memory_space<vmem>>, vector<128x128xf32>
    %c0_5 = arith.constant 0 : index
    %c0_6 = arith.constant 0 : index
    %9 = vector.load %arg7[%c0_5, %c0_6] : memref<16x128xf32, #tpu.memory_space<vmem>>, vector<16x128xf32>
    %cst = arith.constant dense<0.000000e+00> : vector<16x128xf32>
    %10 = tpu.matmul %7, %8, %cst {dimension_numbers = #tpu.dot_dimension_numbers<[1], [0], [0], [1], [0, 0, 1, 1], [], []>} : vector<16x128xf32>, vector<128x128xf32>, vector<16x128xf32> -> vector<16x128xf32>
    %11 = arith.addf %9, %10 : vector<16x128xf32>
    %c0_7 = arith.constant 0 : index
    %c0_8 = arith.constant 0 : index
    %12 = vector.load %arg7[%c0_7, %c0_8] : memref<16x128xf32, #tpu.memory_space<vmem>>, vector<16x128xf32>
    tpu.vector_store %arg7[%c0_7, %c0_8], %11 {strides = array<i32>} : memref<16x128xf32, #tpu.memory_space<vmem>>, vector<16x128xf32>,
    %c0_i32_9 = arith.constant 0 : i32
    %13 = arith.cmpi eq, %arg2, %c0_i32_9 : i32
    %14 = arith.extui %13 : i1 to i32
    %c0_i32_10 = arith.constant 0 : i32
    %15 = arith.cmpi ne, %14, %c0_i32_10 : i32
    scf.if %15 {
      %c0_11 = arith.constant 0 : index
      %c0_12 = arith.constant 0 : index
      %16 = vector.load %arg7[%c0_11, %c0_12] : memref<16x128xf32, #tpu.memory_space<vmem>>, vector<16x128xf32>
      %c0_13 = arith.constant 0 : index
      %c0_14 = arith.constant 0 : index
      %17 = vector.load %arg6[%c0_13, %c0_14] : memref<1x128xf32, #tpu.memory_space<vmem>>, vector<1x128xf32>
      %18 = vector.broadcast %17 : vector<1x128xf32> to vector<16x128xf32>
      %19 = arith.addf %16, %18 : vector<16x128xf32>
      %c0_15 = arith.constant 0 : index
      %c0_16 = arith.constant 0 : index
      %20 = vector.load %arg7[%c0_15, %c0_16] : memref<16x128xf32, #tpu.memory_space<vmem>>, vector<16x128xf32>
      tpu.vector_store %arg7[%c0_15, %c0_16], %19 {strides = array<i32>} : memref<16x128xf32, #tpu.memory_space<vmem>>, vector<16x128xf32>,
    } else {
    }
    return
  }
  func.func @transform_0(%arg0: i32, %arg1: i32, %arg2: i32) -> (i32, i32) {
    %c0_i32 = arith.constant 0 : i32
    return %arg0, %arg2 : i32, i32
  }
  func.func @transform_1(%arg0: i32, %arg1: i32, %arg2: i32) -> (i32, i32) {
    %c0_i32 = arith.constant 0 : i32
    %c0_i32_0 = arith.constant 0 : i32
    %c0_i32_1 = arith.constant 0 : i32
    return %c0_i32, %c0_i32_0 : i32, i32
  }
  func.func @transform_2(%arg0: i32, %arg1: i32, %arg2: i32) -> (i32, i32) {
    %c0_i32 = arith.constant 0 : i32
    return %arg2, %arg1 : i32, i32
  }
  func.func @transform_3(%arg0: i32, %arg1: i32, %arg2: i32) -> (i32, i32) {
    %c0_i32 = arith.constant 0 : i32
    %c0_i32_0 = arith.constant 0 : i32
    return %c0_i32, %arg1 : i32, i32
  }
  func.func @transform_4(%arg0: i32, %arg1: i32, %arg2: i32) -> (i32, i32) {
    %c0_i32 = arith.constant 0 : i32
    return %arg0, %arg1 : i32, i32
  }
}

</mosaic_0001>

<llo_original>
// kernel: _lambda_.1
$region0: #{_lambda_.1}
  #allocation0 [shape = 'u32[]', space=smem, size = 0x4, offset = 0x4, fixed_abs, tag = 'smem constant byte address 0x4 - core index']
  #allocation1 [shape = 'u32[144,128]{1,0:T(1,128)}', space=vmem, size = 0x12000, scoped, tag = 'internal scratch']
  %s0 = inlined_call_operand.vmem [shape: f32[16,128], index: 0, kind: input, shape index: {}]
  %s1 = inlined_call_operand.vmem [shape: f32[1,128], index: 1, kind: input, shape index: {}]
  %s2 = inlined_call_operand.hbm [shape: f32[128,128], index: 2, kind: input, shape index: {}]
  %s3 = inlined_call_operand.vmem [shape: f32[1,128], index: 3, kind: input, shape index: {}]
  %s4 = inlined_call_operand.vmem [shape: f32[16,128], index: 4, kind: output, shape index: {}]
  %s5 = sld [smem:[#allocation0]]
  $region38: #{_lambda_.1} parent=0
    _
  %s7 = ssub.s32 1, %s5
  %s8 = scalar_select 0, %s7, %s5
  $region1: #{_lambda_.1} parent=0
    #allocation2 [shape = 'u8[65536]{0}', space=vmem, size = 0x10000, scoped, tag = 'input window, operand 2, single buffered']
    #allocation3 [shape = 's32[1]{0}', space=sflag, size = 0x4, scoped, tag = 'scoped memory for _lambda_.1']
    %9 = vsyncpa [#allocation3], 0
    // Predicated region
    $region2: #{_lambda_.1} parent=1 // pred_check
      _
    $region3: #{_lambda_.1} parent=1 // pred_check_branch
      %11 = sbr.rel (0) target = $region5
    $region4: #{_lambda_.1} parent=1 // pred_region
      _
    $region5: #{_lambda_.1} parent=1 // pred_fallthru
      _
    // Predicated region
    $region6: #{_lambda_.1} parent=1 // pred_check
      _
    $region7: #{_lambda_.1} parent=1 // pred_check_branch
      %13 = sbr.rel (0) target = $region9
    $region8: #{_lambda_.1} parent=1 // pred_region
      _
    $region9: #{_lambda_.1} parent=1 // pred_fallthru
      _
    // Predicated region
    $region10: #{_lambda_.1} parent=1 // pred_check
      _
    $region11: #{_lambda_.1} parent=1 // pred_check_branch
      %15 = sbr.rel (0) target = $region13
    $region12: #{_lambda_.1} parent=1 // pred_region
      %s17 = ssub.s32 2048, 2048
      %18 = vsyncadd [#allocation3], %s17
      %s19 = sshll.u32 [#allocation2], 4
      %s20 = int_to_ptr.vmem [resolvable:$true] %s19
      %25 = dma.hbm_to_vmem [thread:$0]  %s2, 2048, %s20, [#allocation3], 128, 128, 8
    $region13: #{_lambda_.1} parent=1 // pred_fallthru
      _
    // Predicated region
    $region14: #{_lambda_.1} parent=1 // pred_check
      _
    $region15: #{_lambda_.1} parent=1 // pred_check_branch
      %27 = sbr.rel (0) target = $region17
    $region16: #{_lambda_.1} parent=1 // pred_region
      _
    $region17: #{_lambda_.1} parent=1 // pred_fallthru
      _
    // Predicated region
    $region18: #{_lambda_.1} parent=1 // pred_check
      _
    $region19: #{_lambda_.1} parent=1 // pred_check_branch
      %29 = sbr.rel (0) target = $region21
    $region20: #{_lambda_.1} parent=1 // pred_region
      %30 = dma.done [#allocation3], 2048
    $region21: #{_lambda_.1} parent=1 // pred_fallthru
      _
    %p31 = scmp.eq.s32.totalorder 0, 0
    // Predicated region
    $region22: #{_lambda_.1} parent=1 // pred_check
      %p32 = pneg %p31
    $region23: #{_lambda_.1} parent=1 // pred_check_branch
      %34 = sbr.rel (%p32) target = $region25
    $region24: #{_lambda_.1} parent=1 // pred_region
      %35 = vst [vmem:[%s4] sm:$0xff] 0.0
      %36 = vst [vmem:[%s4 + $0x8] sm:$0xff] 0.0
    $region25: #{_lambda_.1} parent=1 // pred_fallthru
      _
    %v37 = vld [vmem:[%s0] sm:$0xff]
    %v38 = vld [vmem:[%s0 + $0x8] sm:$0xff]
    %v39 = vld [vmem:[%s1] sm:$0x1]
    %v41 = vlaneseq
    %v42 = vshrl.u32 %v41, 7
    %v43 = vsub.s32 0, %v42
    %v44 = vrot.slane %v39, %v43
    %v46 = vmul.f32 %v37, %v44
    %v47 = vmul.f32 %v38, %v44
    %v48 = vld [vmem:[#allocation2] sm:$0xff]
    %v49 = vld [vmem:[#allocation2 + $0x8] sm:$0xff]
    %v50 = vld [vmem:[#allocation2 + $0x10] sm:$0xff]
    %v51 = vld [vmem:[#allocation2 + $0x18] sm:$0xff]
    %v52 = vld [vmem:[#allocation2 + $0x20] sm:$0xff]
    %v53 = vld [vmem:[#allocation2 + $0x28] sm:$0xff]
    %v54 = vld [vmem:[#allocation2 + $0x30] sm:$0xff]
    %v55 = vld [vmem:[#allocation2 + $0x38] sm:$0xff]
    %v56 = vld [vmem:[#allocation2 + $0x40] sm:$0xff]
    %v57 = vld [vmem:[#allocation2 + $0x48] sm:$0xff]
    %v58 = vld [vmem:[#allocation2 + $0x50] sm:$0xff]
    %v59 = vld [vmem:[#allocation2 + $0x58] sm:$0xff]
    %v60 = vld [vmem:[#allocation2 + $0x60] sm:$0xff]
    %v61 = vld [vmem:[#allocation2 + $0x68] sm:$0xff]
    %v62 = vld [vmem:[#allocation2 + $0x70] sm:$0xff]
    %v63 = vld [vmem:[#allocation2 + $0x78] sm:$0xff]
    %v64 = vld [vmem:[%s4] sm:$0xff]
    %v65 = vld [vmem:[%s4 + $0x8] sm:$0xff]
    %66 = vmatprep.subr.mxu0 0.0
    %67 = vmatpush1.msra.mxu0 %v48
    %68 = vmatprep.subr.mxu0 0.0
    %69 = vmatpush1.msra.mxu0 %v49
    %70 = vmatprep.subr.mxu0 0.0
    %71 = vmatpush1.msra.mxu0 %v50
    %72 = vmatprep.subr.mxu0 0.0
    %73 = vmatpush1.msra.mxu0 %v51
    %74 = vmatprep.subr.mxu0 0.0
    %75 = vmatpush1.msra.mxu0 %v52
    %76 = vmatprep.subr.mxu0 0.0
    %77 = vmatpush1.msra.mxu0 %v53
    %78 = vmatprep.subr.mxu0 0.0
    %79 = vmatpush1.msra.mxu0 %v54
    %80 = vmatprep.subr.mxu0 0.0
    %81 = vmatpush1.msra.mxu0 %v55
    %82 = vmatprep.subr.mxu0 0.0
    %83 = vmatpush1.msra.mxu0 %v56
    %84 = vmatprep.subr.mxu0 0.0
    %85 = vmatpush1.msra.mxu0 %v57
    %86 = vmatprep.subr.mxu0 0.0
    %87 = vmatpush1.msra.mxu0 %v58
    %88 = vmatprep.subr.mxu0 0.0
    %89 = vmatpush1.msra.mxu0 %v59
    %90 = vmatprep.subr.mxu0 0.0
    %91 = vmatpush1.msra.mxu0 %v60
    %92 = vmatprep.subr.mxu0 0.0
    %93 = vmatpush1.msra.mxu0 %v61
    %94 = vmatprep.subr.mxu0 0.0
    %95 = vmatpush1.msra.mxu0 %v62
    %96 = vmatprep.subr.mxu0 0.0
    %97 = vmatpush1.msra.mxu0 %v63
    %98 = vmatprep.subr.mxu0 0.0
    %99 = vmatpush1.msra.mxu0 0.0
    %100 = vmatprep.subr.mxu0 0.0
    %101 = vmatpush1.msra.mxu0 0.0
    %102 = vmatprep.subr.mxu0 0.0
    %103 = vmatpush1.msra.mxu0 0.0
    %104 = vmatprep.subr.mxu0 0.0
    %105 = vmatpush1.msra.mxu0 0.0
    %106 = vmatprep.subr.mxu0 0.0
    %107 = vmatpush1.msra.mxu0 0.0
    %108 = vmatprep.subr.mxu0 0.0
    %109 = vmatpush1.msra.mxu0 0.0
    %110 = vmatprep.subr.mxu0 0.0
    %111 = vmatpush1.msra.mxu0 0.0
    %112 = vmatprep.subr.mxu0 0.0
    %113 = vmatpush1.msra.mxu0 0.0
    %114 = vmatprep.subr.mxu0 0.0
    %115 = vmatpush1.msra.mxu0 0.0
    %116 = vmatprep.subr.mxu0 0.0
    %117 = vmatpush1.msra.mxu0 0.0
    %118 = vmatprep.subr.mxu0 0.0
    %119 = vmatpush1.msra.mxu0 0.0
    %120 = vmatprep.subr.mxu0 0.0
    %121 = vmatpush1.msra.mxu0 0.0
    %122 = vmatprep.subr.mxu0 0.0
    %123 = vmatpush1.msra.mxu0 0.0
    %124 = vmatprep.subr.mxu0 0.0
    %125 = vmatpush1.msra.mxu0 0.0
    %126 = vmatprep.subr.mxu0 0.0
    %127 = vmatpush1.msra.mxu0 0.0
    %128 = vmatprep.subr.mxu0 0.0
    %129 = vmatpush1.msra.mxu0 0.0
    %130 = vmatprep.mubr.f32.mxu0 0.0
    %131 = vmatmul.mubr.f32.gmra.mrb[0].mxu0 %v46
    %v132 = vpop.f32.mrb[0].mxu0
    %v133 = vadd.f32 0.0, %v132
    %v134 = vpop.f32.mrb[0].mxu0
    %135 = vmatprep.mubr.f32.mxu0 0.0
    %136 = vmatmul.mubr.f32.gmra.mrb[0].mxu0 %v47
    %v137 = vpop.f32.mrb[0].mxu0
    %v138 = vadd.f32 0.0, %v137
    %v139 = vpop.f32.mrb[0].mxu0
    %140 = vdwg.mxu0
    %v141 = vadd.f32 %v64, %v133
    %v142 = vadd.f32 %v65, %v138
    %143 = vst [vmem:[%s4] sm:$0xff] %v141
    %144 = vst [vmem:[%s4 + $0x8] sm:$0xff] %v142
    // Predicated region
    $region26: #{_lambda_.1} parent=1 // pred_check
      %p145 = pneg %p31
    $region27: #{_lambda_.1} parent=1 // pred_check_branch
      %147 = sbr.rel (%p145) target = $region29
    $region28: #{_lambda_.1} parent=1 // pred_region
      %v148 = vld [vmem:[%s4] sm:$0xff]
      %v149 = vld [vmem:[%s4 + $0x8] sm:$0xff]
      %v150 = vld [vmem:[%s3] sm:$0x1]
      %v152 = vlaneseq
      %v153 = vshrl.u32 %v152, 7
      %v154 = vsub.s32 0, %v153
      %v155 = vrot.slane %v150, %v154
      %v157 = vadd.f32 %v148, %v155
      %v158 = vadd.f32 %v149, %v155
      %159 = vst [vmem:[%s4] sm:$0xff] %v157
      %160 = vst [vmem:[%s4 + $0x8] sm:$0xff] %v158
    $region29: #{_lambda_.1} parent=1 // pred_fallthru
      _
    // Predicated region
    $region30: #{_lambda_.1} parent=1 // pred_check
      _
    $region31: #{_lambda_.1} parent=1 // pred_check_branch
      %162 = sbr.rel (0) target = $region33
    $region32: #{_lambda_.1} parent=1 // pred_region
      _
    $region33: #{_lambda_.1} parent=1 // pred_fallthru
      _
    // Predicated region
    $region34: #{_lambda_.1} parent=1 // pred_check
      _
    $region35: #{_lambda_.1} parent=1 // pred_check_branch
      %164 = sbr.rel (0) target = $region37
    $region36: #{_lambda_.1} parent=1 // pred_region
      _
    $region37: #{_lambda_.1} parent=1 // pred_fallthru
      _
    %165 = vsyncpa [#allocation3], 1

</llo_original>
